<compile_context>
chip_gen: v5e
topology: v5e:2x2
jax: 0.10.0
libtpu: 0.0.40
codegen_flags: <defaults>
</compile_context>

<pallas_src>
import functools

import jax
import jax.numpy as jnp
import numpy as np
from jax.experimental import pallas as pl
from jax.experimental.pallas import tpu as pltpu

# ---------------------------------------------------------------------------
# Problem sizes
# ---------------------------------------------------------------------------
B = 256          # batch (batched per perf review)
S = 8            # text sequence length
VOCAB = 32       # synthetic vocab size
HT = 32          # pooled text feature dim (synthetic text tower width)
C, H, W = 3, 16, 16   # pixel_values: NCHW
PATCH = 8
HI = C * (H // PATCH) * (W // PATCH) * 4   # = 48 pooled image feats
HF = HT + HI                               # = 80 concatenated pooled feats
HF_PAD = 128     # contraction dim padded to a full lane tile
EMB = 512        # CLIP projection dim -> cat gives 1024 -> Linear(1024, 1)

# Augmented-weight row layout (rows = "output" axis of the fused dot q = W @ f):
#   [0,  32) : G_t = W_text @ W_text^T   (text Gram block)      -> q = G_t f_t
#   [32, 80) : G_i = W_img  @ W_img^T    (image Gram block)     -> q = G_i f_i
#   80       : g_t = W_text @ wr_t       (folded text regressor)
#   81       : g_i = W_img  @ wr_i       (folded image regressor)
#   [82, 88) : zero padding (rows rounded up to a multiple of 8)
ROW_G = HF           # 80 (regressor rows are adjacent: same 8-row sublane group)
ROWS_AUG = 88


def _round_up(x, m):
    return ((x + m - 1) // m) * m


def pick_tile_b(batch):
    """Batch-tile (lane) width per grid step, per TPU generation."""
    try:
        kind = jax.devices()[0].device_kind.lower()
    except Exception:
        kind = ""
    dual_core = ("v7" in kind) or ("7x" in kind)
    if dual_core and batch >= 256:
        return 128            # >=2 parallel batch tiles -> both TensorCores busy
    # single-core chips (v5e/v6e) or small batch: one grid step is cheapest
    return max(128, min(_round_up(batch, 128), 256))


# ---------------------------------------------------------------------------
# Pallas kernel: fused Gram-form norms + folded regressor for one batch tile
# ---------------------------------------------------------------------------
def clip_regressor_kernel(w_ref, feat_ref, b_ref, out_ref):
    # w_ref:    (ROWS_AUG, HF_PAD)  f32  augmented weights (layout above)
    # feat_ref: (HF_PAD, TILE_B)    f32  pooled [text ; image] feats, batch on lanes
    # b_ref:    (1,)                f32  regressor bias (SMEM)
    # out_ref:  (1, TILE_B)         f32  regression outputs (lane-dense)
    #
    # Single small MXU push: Gram products and the folded-regressor dots.
    q = jnp.dot(w_ref[...], feat_ref[...], preferred_element_type=jnp.float32)

    f = feat_ref[:HF, :]                    # (HF, T)   pooled features
    prod = f * q[:HF, :]                    # f .* (G f) rowwise
    # Squared L2 norms via sublane reductions -> results land lane-dense.
    nt = jnp.sum(prod[:HT, :], axis=0, keepdims=True)   # (1, T) ||W_t^T f_t||^2
    ni = jnp.sum(prod[HT:, :], axis=0, keepdims=True)   # (1, T) ||W_i^T f_i||^2

    # CLIP's L2 normalization reordered past the linear regressor:
    #   (t/||t||) . wr_t == (t . wr_t) * rsqrt(t . t)
    # NOTE: matches PyTorch/CLIP exactly (no epsilon); a zero-norm embedding
    # would give inf/NaN in both kernel and reference.
    inv = jax.lax.rsqrt(jnp.concatenate([nt, ni], axis=0))   # (2, T) on the EUP
    d = q[ROW_G:ROW_G + 2, :]               # (2, T): [f_t.g_t ; f_i.g_i] (aligned slice)
    y = jnp.sum(d * inv, axis=0, keepdims=True) + b_ref[0]
    out_ref[...] = y.astype(out_ref.dtype)


# ---------------------------------------------------------------------------
# Host-side weight prep (hoisted: call ONCE, reuse across forward calls)
# ---------------------------------------------------------------------------
def prepare_clip_regressor_params(w_text, w_img, w_reg, b_reg):
    # Gram matrices for the squared-norm quadratic forms.
    g_t = w_text @ w_text.T                 # (HT, HT)
    g_i = w_img @ w_img.T                   # (HI, HI)
    # Fold the Linear(1024, 1) halves into the projections.
    r_t = w_text @ w_reg[0, :EMB]           # (HT,)
    r_i = w_img @ w_reg[0, EMB:]            # (HI,)

    w_aug = jnp.zeros((ROWS_AUG, HF_PAD), jnp.float32)
    w_aug = w_aug.at[:HT, :HT].set(g_t)             # block-diagonal stack ==
    w_aug = w_aug.at[HT:HF, HT:HF].set(g_i)         # implicit concat, 1 MXU dot
    w_aug = w_aug.at[ROW_G, :HT].set(r_t)
    w_aug = w_aug.at[ROW_G + 1, HT:HF].set(r_i)
    return w_aug, jnp.asarray(b_reg, jnp.float32)


# ---------------------------------------------------------------------------
# Regressor head (pallas_call) + jitted end-to-end forward
# ---------------------------------------------------------------------------
def _regressor_head(w_aug, b_reg, txt_pooled, img_pooled, *, tile_b):
    bsz = txt_pooled.shape[0]

    # Concatenate pooled features once, transpose so batch lives on lanes.
    featT = jnp.concatenate([txt_pooled, img_pooled], axis=-1).T   # (HF, B)
    featT = featT.astype(jnp.float32)
    featT = jnp.pad(featT, ((0, HF_PAD - HF), (0, 0)))             # K: 80 -> 128 (zeros)

    n_tiles = pl.cdiv(bsz, tile_b)
    b_pad = n_tiles * tile_b
    if b_pad != bsz:
        # 1.0 padding keeps padded lanes' norms nonzero (no inf/NaN); those
        # lanes are sliced off before returning.
        featT = jnp.pad(featT, ((0, 0), (0, b_pad - bsz)), constant_values=1.0)

    out = pl.pallas_call(
        clip_regressor_kernel,
        out_shape=jax.ShapeDtypeStruct((1, b_pad), jnp.float32),
        grid=(n_tiles,),
        in_specs=[
            pl.BlockSpec((ROWS_AUG, HF_PAD), lambda i: (0, 0)),     # weights: resident
            pl.BlockSpec((HF_PAD, tile_b), lambda i: (0, i)),       # batch tile (lanes)
            pl.BlockSpec(memory_space=pltpu.MemorySpace.SMEM),      # scalar bias
        ],
        out_specs=pl.BlockSpec((1, tile_b), lambda i: (0, i)),      # lane-dense output
        compiler_params=pltpu.CompilerParams(
            dimension_semantics=("parallel",)),   # batch tiles split across TCs (v7x)
    )(w_aug, featT, b_reg)

    return out[0, :bsz].reshape(bsz, 1)


# ---------------------------------------------------------------------------
# Plain-JAX glue: synthetic CLIP feature pooling (stand-in for the backbone)
# ---------------------------------------------------------------------------
def pool_text(input_ids, attention_mask, token_emb):
    # masked mean-pool of token embeddings -> (B, HT)
    emb = token_emb[input_ids]                                 # (B, S, HT)
    mask = attention_mask.astype(jnp.float32)[..., None]       # (B, S, 1)
    summed = jnp.sum(emb * mask, axis=1)                       # (B, HT)
    denom = jnp.maximum(jnp.sum(mask, axis=1), 1.0)            # (B, 1)
    return summed / denom


def pool_image(pixel_values):
    # NCHW -> per-patch mean pool -> (B, C * Hp * Wp * 4)
    b, c, h, w = pixel_values.shape
    hp, wp = h // PATCH, w // PATCH
    x = pixel_values.reshape(b, c, hp, PATCH // 2, 2, wp, PATCH // 2, 2)
    x = jnp.mean(x, axis=(3, 6))                               # (B, C, hp, 2, wp, 2)
    return x.reshape(b, -1).astype(jnp.float32)                # (B, HI)


@functools.partial(jax.jit, static_argnames=("tile_b",))
def clip_regressor_forward(w_aug, b_reg, token_emb,
                           input_ids, attention_mask, pixel_values, *, tile_b):
    # Entire forward (pooling + feature prep + pallas_call) fused under one jit.
    txt_pooled = pool_text(input_ids, attention_mask, token_emb)   # (B, HT)
    img_pooled = pool_image(pixel_values)                          # (B, HI)
    return _regressor_head(w_aug, b_reg, txt_pooled, img_pooled, tile_b=tile_b)


# ---------------------------------------------------------------------------
# Reference (pure JAX, f32) for correctness
# ---------------------------------------------------------------------------
def reference(txt_pooled, img_pooled, w_text, w_img, w_reg, b_reg):
    t = txt_pooled @ w_text
    i = img_pooled @ w_img
    t = t / jnp.linalg.norm(t, axis=-1, keepdims=True)
    i = i / jnp.linalg.norm(i, axis=-1, keepdims=True)
    combined = jnp.concatenate([t, i], axis=-1)                # (B, 1024)
    return combined @ w_reg.T + b_reg                          # (B, 1)


if __name__ == "__main__":
    key = jax.random.PRNGKey(0)
    k_ids, k_pix, k_tok, k_wt, k_wi, k_wr, k_br = jax.random.split(key, 7)

    # Example inputs (shapes consistent with CLIPRegressor.forward)
    input_ids = jax.random.randint(k_ids, (B, S), 0, VOCAB, dtype=jnp.int32)
    attention_mask = jnp.ones((B, S), dtype=jnp.int32).at[1::2, S - 2:].set(0)
    pixel_values = jax.random.normal(k_pix, (B, C, H, W), dtype=jnp.float32)

    # Deterministic synthetic parameters
    token_emb = jax.random.normal(k_tok, (VOCAB, HT), jnp.float32) * 0.02
    w_text = jax.random.normal(k_wt, (HT, EMB), jnp.float32) * (1.0 / np.sqrt(HT))
    w_img = jax.random.normal(k_wi, (HI, EMB), jnp.float32) * (1.0 / np.sqrt(HI))
    # nn.Linear(1024, 1): weight (1, 1024), bias (1,)
    w_reg = jax.random.uniform(k_wr, (1, 2 * EMB), jnp.float32,
                               minval=-1.0 / np.sqrt(2.0 * EMB),
                               maxval=1.0 / np.sqrt(2.0 * EMB))
    b_reg = jax.random.uniform(k_br, (1,), jnp.float32,
                               minval=-1.0 / np.sqrt(2.0 * EMB),
                               maxval=1.0 / np.sqrt(2.0 * EMB))

    # One-time weight prep (hoisted out of the per-call path) + tile choice.
    w_aug, b_reg_f32 = prepare_clip_regressor_params(w_text, w_img, w_reg, b_reg)
    tile_b = pick_tile_b(B)

    # Fused forward (jitted: pooling + feature prep + Pallas kernel).
    out = clip_regressor_forward(w_aug, b_reg_f32, token_emb,
                                 input_ids, attention_mask, pixel_values,
                                 tile_b=tile_b)
    out = jax.block_until_ready(out)

    # Check against pure-JAX f32 reference.
    txt_pooled = pool_text(input_ids, attention_mask, token_emb)
    img_pooled = pool_image(pixel_values)
    ref = reference(txt_pooled, img_pooled, w_text, w_img, w_reg, b_reg)
    assert out.shape == (B, 1)
    np.testing.assert_allclose(np.asarray(out), np.asarray(ref),
                               rtol=3e-2, atol=3e-3)
    print("KERNEL_OK")
</pallas_src>

<mosaic_0001>
module attributes {stable_mosaic.version = 11 : i64} {
  func.func @clip_regressor_kernel(%arg0: i32, %arg1: memref<88x128xf32, #tpu.memory_space<vmem>>, %arg2: memref<128x256xf32, #tpu.memory_space<vmem>>, %arg3: memref<1xf32, #tpu.memory_space<smem>>, %arg4: memref<1x256xf32, #tpu.memory_space<vmem>>) attributes {dimension_semantics = [#tpu.dimension_semantics<parallel>], iteration_bounds = array<i64: 1>, scalar_prefetch = 0 : i64, scratch_operands = 0 : i64, tpu.core_type = #tpu.core_type<tc>, window_params = [{pipeline_mode = #tpu.pipeline_mode<synchronous>, transform_indices = @transform_0, window_bounds = array<i64: 88, 128>}, {transform_indices = @transform_1, window_bounds = array<i64: 128, 256>}, {transform_indices = @transform_2, window_bounds = array<i64: 1>}, {transform_indices = @transform_3, window_bounds = array<i64: 1, 256>}]} {
    %c0 = arith.constant 0 : index
    %c0_0 = arith.constant 0 : index
    %0 = vector.load %arg1[%c0, %c0_0] : memref<88x128xf32, #tpu.memory_space<vmem>>, vector<88x128xf32>
    %c0_1 = arith.constant 0 : index
    %c0_2 = arith.constant 0 : index
    %1 = vector.load %arg2[%c0_1, %c0_2] : memref<128x256xf32, #tpu.memory_space<vmem>>, vector<128x256xf32>
    %cst = arith.constant dense<0.000000e+00> : vector<88x256xf32>
    %2 = tpu.matmul %0, %1, %cst {dimension_numbers = #tpu.dot_dimension_numbers<[1], [0], [0], [1], [0, 0, 1, 1], [], []>} : vector<88x128xf32>, vector<128x256xf32>, vector<88x256xf32> -> vector<88x256xf32>
    %c0_3 = arith.constant 0 : index
    %c0_4 = arith.constant 0 : index
    %3 = vector.load %arg2[%c0_3, %c0_4] : memref<128x256xf32, #tpu.memory_space<vmem>>, vector<80x256xf32>
    %4 = vector.extract_strided_slice %2 {offsets = [0, 0], sizes = [80, 256], strides = [1, 1]} : vector<88x256xf32> to vector<80x256xf32>
    %5 = arith.mulf %3, %4 : vector<80x256xf32>
    %6 = vector.extract_strided_slice %5 {offsets = [0, 0], sizes = [32, 256], strides = [1, 1]} : vector<80x256xf32> to vector<32x256xf32>
    %cst_5 = arith.constant dense<0.000000e+00> : vector<256xf32>
    %7 = vector.multi_reduction <add>, %6, %cst_5 [0] : vector<32x256xf32> to vector<256xf32>
    %8 = vector.shape_cast %7 : vector<256xf32> to vector<1x256xf32>
    %9 = vector.extract_strided_slice %5 {offsets = [32, 0], sizes = [48, 256], strides = [1, 1]} : vector<80x256xf32> to vector<48x256xf32>
    %cst_6 = arith.constant dense<0.000000e+00> : vector<256xf32>
    %10 = vector.multi_reduction <add>, %9, %cst_6 [0] : vector<48x256xf32> to vector<256xf32>
    %11 = vector.shape_cast %10 : vector<256xf32> to vector<1x256xf32>
    %12 = tpu.concatenate %8, %11 in 0 : vector<1x256xf32>, vector<1x256xf32> -> vector<2x256xf32>
    %13 = math.rsqrt %12 : vector<2x256xf32>
    %14 = vector.extract_strided_slice %2 {offsets = [80, 0], sizes = [2, 256], strides = [1, 1]} : vector<88x256xf32> to vector<2x256xf32>
    %15 = arith.mulf %14, %13 : vector<2x256xf32>
    %cst_7 = arith.constant dense<0.000000e+00> : vector<256xf32>
    %16 = vector.multi_reduction <add>, %15, %cst_7 [0] : vector<2x256xf32> to vector<256xf32>
    %17 = vector.shape_cast %16 : vector<256xf32> to vector<1x256xf32>
    %c0_8 = arith.constant 0 : index
    %18 = memref.load %arg3[%c0_8] : memref<1xf32, #tpu.memory_space<smem>>
    %19 = vector.broadcast %18 : f32 to vector<1x256xf32>
    %20 = arith.addf %17, %19 : vector<1x256xf32>
    %c0_9 = arith.constant 0 : index
    %c0_10 = arith.constant 0 : index
    %21 = vector.load %arg4[%c0_9, %c0_10] : memref<1x256xf32, #tpu.memory_space<vmem>>, vector<1x256xf32>
    tpu.vector_store %arg4[%c0_9, %c0_10], %20 {strides = array<i32>} : memref<1x256xf32, #tpu.memory_space<vmem>>, vector<1x256xf32>,
    return
  }
  func.func @transform_0(%arg0: i32) -> (i32, i32) {
    %c0_i32 = arith.constant 0 : i32
    %c0_i32_0 = arith.constant 0 : i32
    %c0_i32_1 = arith.constant 0 : i32
    return %c0_i32, %c0_i32_0 : i32, i32
  }
  func.func @transform_1(%arg0: i32) -> (i32, i32) {
    %c0_i32 = arith.constant 0 : i32
    %c0_i32_0 = arith.constant 0 : i32
    return %c0_i32, %arg0 : i32, i32
  }
  func.func @transform_2(%arg0: i32) -> i32 {
    %c0_i32 = arith.constant 0 : i32
    %c0_i32_0 = arith.constant 0 : i32
    return %c0_i32 : i32
  }
  func.func @transform_3(%arg0: i32) -> (i32, i32) {
    %c0_i32 = arith.constant 0 : i32
    %c0_i32_0 = arith.constant 0 : i32
    return %c0_i32, %arg0 : i32, i32
  }
}

</mosaic_0001>

<llo_original>
// kernel: clip_regressor_forward.1
$region0: #{clip_regressor_forward.1}
  #allocation0 [shape = 'u32[]', space=smem, size = 0x4, offset = 0x4, fixed_abs, tag = 'smem constant byte address 0x4 - core index']
  #allocation1 [shape = 'u32[72,128]{1,0:T(1,128)}', space=vmem, size = 0x9000, scoped, tag = 'internal scratch']
  #allocation2 [shape = 'f32[1]{0:T(128)S(6)}', space=smem, size = 0x200, scoped, tag = 'scoped memory for clip_regressor_forward.1']
  %s0 = inlined_call_operand.vmem [shape: f32[88,128], index: 0, kind: input, shape index: {}]
  %s1 = inlined_call_operand.vmem [shape: f32[128,256], index: 1, kind: input, shape index: {}]
  %s2 = inlined_call_operand.<no memory space> [shape: f32[1], index: 2, kind: input, shape index: {}]
  %s3 = inlined_call_operand.hbm [shape: f32[1,256], index: 3, kind: output, shape index: {}]
  %s4 = sld [smem:[#allocation0]]
  $region22: #{clip_regressor_forward.1} parent=0
    _
  %s6 = ssub.s32 1, %s4
  %s7 = scalar_select 0, %s6, %s4
  %8 = sst [smem:[#allocation2]] %s2
  $region1: #{clip_regressor_forward.1} parent=0
    #allocation3 [shape = 'u8[1024]{0}', space=vmem, size = 0x400, scoped, tag = 'output window, operand 0, single buffered']
    #allocation4 [shape = 's32[1]{0}', space=sflag, size = 0x4, scoped, tag = 'scoped memory for clip_regressor_forward.1']
    %9 = vsyncpa [#allocation4], 0
    // Predicated region
    $region2: #{clip_regressor_forward.1} parent=1 // pred_check
      _
    $region3: #{clip_regressor_forward.1} parent=1 // pred_check_branch
      %11 = sbr.rel (0) target = $region5
    $region4: #{clip_regressor_forward.1} parent=1 // pred_region
      _
    $region5: #{clip_regressor_forward.1} parent=1 // pred_fallthru
      _
    // Predicated region
    $region6: #{clip_regressor_forward.1} parent=1 // pred_check
      _
    $region7: #{clip_regressor_forward.1} parent=1 // pred_check_branch
      %13 = sbr.rel (0) target = $region9
    $region8: #{clip_regressor_forward.1} parent=1 // pred_region
      _
    $region9: #{clip_regressor_forward.1} parent=1 // pred_fallthru
      _
    // Predicated region
    $region10: #{clip_regressor_forward.1} parent=1 // pred_check
      _
    $region11: #{clip_regressor_forward.1} parent=1 // pred_check_branch
      %15 = sbr.rel (0) target = $region13
    $region12: #{clip_regressor_forward.1} parent=1 // pred_region
      _
    $region13: #{clip_regressor_forward.1} parent=1 // pred_fallthru
      _
    %v16 = vld [vmem:[%s0] sm:$0xff]
    %v17 = vld [vmem:[%s0 + $0x8] sm:$0xff]
    %v18 = vld [vmem:[%s0 + $0x10] sm:$0xff]
    %v19 = vld [vmem:[%s0 + $0x18] sm:$0xff]
    %v20 = vld [vmem:[%s0 + $0x20] sm:$0xff]
    %v21 = vld [vmem:[%s0 + $0x28] sm:$0xff]
    %v22 = vld [vmem:[%s0 + $0x30] sm:$0xff]
    %v23 = vld [vmem:[%s0 + $0x38] sm:$0xff]
    %v24 = vld [vmem:[%s0 + $0x40] sm:$0xff]
    %v25 = vld [vmem:[%s0 + $0x48] sm:$0xff]
    %v26 = vld [vmem:[%s0 + $0x50] sm:$0xff]
    %v27 = vld [vmem:[%s1] sm:$0xff]
    %v28 = vld [vmem:[%s1 + $0x8] sm:$0xff]
    %v29 = vld [vmem:[%s1 + $0x10] sm:$0xff]
    %v30 = vld [vmem:[%s1 + $0x18] sm:$0xff]
    %v31 = vld [vmem:[%s1 + $0x20] sm:$0xff]
    %v32 = vld [vmem:[%s1 + $0x28] sm:$0xff]
    %v33 = vld [vmem:[%s1 + $0x30] sm:$0xff]
    %v34 = vld [vmem:[%s1 + $0x38] sm:$0xff]
    %v35 = vld [vmem:[%s1 + $0x40] sm:$0xff]
    %v36 = vld [vmem:[%s1 + $0x48] sm:$0xff]
    %v37 = vld [vmem:[%s1 + $0x50] sm:$0xff]
    %v38 = vld [vmem:[%s1 + $0x58] sm:$0xff]
    %v39 = vld [vmem:[%s1 + $0x60] sm:$0xff]
    %v40 = vld [vmem:[%s1 + $0x68] sm:$0xff]
    %v41 = vld [vmem:[%s1 + $0x70] sm:$0xff]
    %v42 = vld [vmem:[%s1 + $0x78] sm:$0xff]
    %v43 = vld [vmem:[%s1 + $0x80] sm:$0xff]
    %v44 = vld [vmem:[%s1 + $0x88] sm:$0xff]
    %v45 = vld [vmem:[%s1 + $0x90] sm:$0xff]
    %v46 = vld [vmem:[%s1 + $0x98] sm:$0xff]
    %v47 = vld [vmem:[%s1 + $0xa0] sm:$0xff]
    %v48 = vld [vmem:[%s1 + $0xa8] sm:$0xff]
    %v49 = vld [vmem:[%s1 + $0xb0] sm:$0xff]
    %v50 = vld [vmem:[%s1 + $0xb8] sm:$0xff]
    %v51 = vld [vmem:[%s1 + $0xc0] sm:$0xff]
    %v52 = vld [vmem:[%s1 + $0xc8] sm:$0xff]
    %v53 = vld [vmem:[%s1 + $0xd0] sm:$0xff]
    %v54 = vld [vmem:[%s1 + $0xd8] sm:$0xff]
    %v55 = vld [vmem:[%s1 + $0xe0] sm:$0xff]
    %v56 = vld [vmem:[%s1 + $0xe8] sm:$0xff]
    %v57 = vld [vmem:[%s1 + $0xf0] sm:$0xff]
    %v58 = vld [vmem:[%s1 + $0xf8] sm:$0xff]
    %59 = vmatpush.msra.mxu0 %v57
    %60 = vmatpush.msra.mxu0 %v55
    %61 = vmatpush.msra.mxu0 %v53
    %62 = vmatpush.msra.mxu0 %v51
    %63 = vmatpush.msra.mxu0 %v49
    %64 = vmatpush.msra.mxu0 %v47
    %65 = vmatpush.msra.mxu0 %v45
    %66 = vmatpush.msra.mxu0 %v43
    %67 = vmatpush.msra.mxu0 %v41
    %68 = vmatpush.msra.mxu0 %v39
    %69 = vmatpush.msra.mxu0 %v37
    %70 = vmatpush.msra.mxu0 %v35
    %71 = vmatpush.msra.mxu0 %v33
    %72 = vmatpush.msra.mxu0 %v31
    %73 = vmatpush.msra.mxu0 %v29
    %74 = vmatpush.msra.mxu0 %v27
    %75 = vmatmul.f32.gmra.mxu0 %v16
    %v76 = vpop.f32.mrf.mxu0
    %v77 = vadd.f32 0.0, %v76
    %78 = vmatmul.f32.gmra.mxu0 %v17
    %v79 = vpop.f32.mrf.mxu0
    %v80 = vadd.f32 0.0, %v79
    %81 = vmatmul.f32.gmra.mxu0 %v18
    %v82 = vpop.f32.mrf.mxu0
    %v83 = vadd.f32 0.0, %v82
    %84 = vmatmul.f32.gmra.mxu0 %v19
    %v85 = vpop.f32.mrf.mxu0
    %v86 = vadd.f32 0.0, %v85
    %87 = vmatmul.f32.gmra.mxu0 %v20
    %v88 = vpop.f32.mrf.mxu0
    %v89 = vadd.f32 0.0, %v88
    %90 = vmatmul.f32.gmra.mxu0 %v21
    %v91 = vpop.f32.mrf.mxu0
    %v92 = vadd.f32 0.0, %v91
    %93 = vmatmul.f32.gmra.mxu0 %v22
    %v94 = vpop.f32.mrf.mxu0
    %v95 = vadd.f32 0.0, %v94
    %96 = vmatmul.f32.gmra.mxu0 %v23
    %v97 = vpop.f32.mrf.mxu0
    %v98 = vadd.f32 0.0, %v97
    %99 = vmatmul.f32.gmra.mxu0 %v24
    %v100 = vpop.f32.mrf.mxu0
    %v101 = vadd.f32 0.0, %v100
    %102 = vmatmul.f32.gmra.mxu0 %v25
    %v103 = vpop.f32.mrf.mxu0
    %v104 = vadd.f32 0.0, %v103
    %105 = vmatmul.f32.gmra.mxu0 %v26
    %v106 = vpop.f32.mrf.mxu0
    %v107 = vadd.f32 0.0, %v106
    %108 = vdwg.mxu0
    %109 = vmatpush.msra.mxu0 %v58
    %110 = vmatpush.msra.mxu0 %v56
    %111 = vmatpush.msra.mxu0 %v54
    %112 = vmatpush.msra.mxu0 %v52
    %113 = vmatpush.msra.mxu0 %v50
    %114 = vmatpush.msra.mxu0 %v48
    %115 = vmatpush.msra.mxu0 %v46
    %116 = vmatpush.msra.mxu0 %v44
    %117 = vmatpush.msra.mxu0 %v42
    %118 = vmatpush.msra.mxu0 %v40
    %119 = vmatpush.msra.mxu0 %v38
    %120 = vmatpush.msra.mxu0 %v36
    %121 = vmatpush.msra.mxu0 %v34
    %122 = vmatpush.msra.mxu0 %v32
    %123 = vmatpush.msra.mxu0 %v30
    %124 = vmatpush.msra.mxu0 %v28
    %125 = vmatmul.f32.gmra.mxu0 %v16
    %v126 = vpop.f32.mrf.mxu0
    %v127 = vadd.f32 0.0, %v126
    %128 = vmatmul.f32.gmra.mxu0 %v17
    %v129 = vpop.f32.mrf.mxu0
    %v130 = vadd.f32 0.0, %v129
    %131 = vmatmul.f32.gmra.mxu0 %v18
    %v132 = vpop.f32.mrf.mxu0
    %v133 = vadd.f32 0.0, %v132
    %134 = vmatmul.f32.gmra.mxu0 %v19
    %v135 = vpop.f32.mrf.mxu0
    %v136 = vadd.f32 0.0, %v135
    %137 = vmatmul.f32.gmra.mxu0 %v20
    %v138 = vpop.f32.mrf.mxu0
    %v139 = vadd.f32 0.0, %v138
    %140 = vmatmul.f32.gmra.mxu0 %v21
    %v141 = vpop.f32.mrf.mxu0
    %v142 = vadd.f32 0.0, %v141
    %143 = vmatmul.f32.gmra.mxu0 %v22
    %v144 = vpop.f32.mrf.mxu0
    %v145 = vadd.f32 0.0, %v144
    %146 = vmatmul.f32.gmra.mxu0 %v23
    %v147 = vpop.f32.mrf.mxu0
    %v148 = vadd.f32 0.0, %v147
    %149 = vmatmul.f32.gmra.mxu0 %v24
    %v150 = vpop.f32.mrf.mxu0
    %v151 = vadd.f32 0.0, %v150
    %152 = vmatmul.f32.gmra.mxu0 %v25
    %v153 = vpop.f32.mrf.mxu0
    %v154 = vadd.f32 0.0, %v153
    %155 = vmatmul.f32.gmra.mxu0 %v26
    %v156 = vpop.f32.mrf.mxu0
    %v157 = vadd.f32 0.0, %v156
    %158 = vdwg.mxu0
    %v159 = vld [vmem:[%s1] sm:$0xff]
    %v160 = vld [vmem:[%s1 + $0x8] sm:$0xff]
    %v161 = vld [vmem:[%s1 + $0x10] sm:$0xff]
    %v162 = vld [vmem:[%s1 + $0x18] sm:$0xff]
    %v163 = vld [vmem:[%s1 + $0x20] sm:$0xff]
    %v164 = vld [vmem:[%s1 + $0x28] sm:$0xff]
    %v165 = vld [vmem:[%s1 + $0x30] sm:$0xff]
    %v166 = vld [vmem:[%s1 + $0x38] sm:$0xff]
    %v167 = vld [vmem:[%s1 + $0x40] sm:$0xff]
    %v168 = vld [vmem:[%s1 + $0x48] sm:$0xff]
    %v169 = vld [vmem:[%s1 + $0x50] sm:$0xff]
    %v170 = vld [vmem:[%s1 + $0x58] sm:$0xff]
    %v171 = vld [vmem:[%s1 + $0x60] sm:$0xff]
    %v172 = vld [vmem:[%s1 + $0x68] sm:$0xff]
    %v173 = vld [vmem:[%s1 + $0x70] sm:$0xff]
    %v174 = vld [vmem:[%s1 + $0x78] sm:$0xff]
    %v175 = vld [vmem:[%s1 + $0x80] sm:$0xff]
    %v176 = vld [vmem:[%s1 + $0x88] sm:$0xff]
    %v177 = vld [vmem:[%s1 + $0x90] sm:$0xff]
    %v178 = vld [vmem:[%s1 + $0x98] sm:$0xff]
    %v179 = vmul.f32 %v159, %v77
    %v180 = vmul.f32 %v160, %v127
    %v181 = vmul.f32 %v161, %v80
    %v182 = vmul.f32 %v162, %v130
    %v183 = vmul.f32 %v163, %v83
    %v184 = vmul.f32 %v164, %v133
    %v185 = vmul.f32 %v165, %v86
    %v186 = vmul.f32 %v166, %v136
    %v187 = vmul.f32 %v167, %v89
    %v188 = vmul.f32 %v168, %v139
    %v189 = vmul.f32 %v169, %v92
    %v190 = vmul.f32 %v170, %v142
    %v191 = vmul.f32 %v171, %v95
    %v192 = vmul.f32 %v172, %v145
    %v193 = vmul.f32 %v173, %v98
    %v194 = vmul.f32 %v174, %v148
    %v195 = vmul.f32 %v175, %v101
    %v196 = vmul.f32 %v176, %v151
    %v197 = vmul.f32 %v177, %v104
    %v198 = vmul.f32 %v178, %v154
    %v199 = vadd.f32 %v179, %v181
    %v200 = vadd.f32 %v199, %v183
    %v201 = vadd.f32 %v200, %v185
    %v202 = vrot.slane %v201, 4
    %v203 = vadd.f32 %v201, %v202
    %v204 = vrot.slane %v203, 2
    %v205 = vadd.f32 %v203, %v204
    %v206 = vrot.slane %v205, 1
    %v207 = vadd.f32 %v205, %v206
    %v208 = vadd.f32 %v180, %v182
    %v209 = vadd.f32 %v208, %v184
    %v210 = vadd.f32 %v209, %v186
    %v211 = vrot.slane %v210, 4
    %v212 = vadd.f32 %v210, %v211
    %v213 = vrot.slane %v212, 2
    %v214 = vadd.f32 %v212, %v213
    %v215 = vrot.slane %v214, 1
    %v216 = vadd.f32 %v214, %v215
    %v217 = vadd.f32 %v187, %v189
    %v218 = vadd.f32 %v217, %v191
    %v219 = vadd.f32 %v218, %v193
    %v220 = vadd.f32 %v219, %v195
    %v221 = vadd.f32 %v220, %v197
    %v222 = vrot.slane %v221, 4
    %v223 = vadd.f32 %v221, %v222
    %v224 = vrot.slane %v223, 2
    %v225 = vadd.f32 %v223, %v224
    %v226 = vrot.slane %v225, 1
    %v227 = vadd.f32 %v225, %v226
    %v228 = vadd.f32 %v188, %v190
    %v229 = vadd.f32 %v228, %v192
    %v230 = vadd.f32 %v229, %v194
    %v231 = vadd.f32 %v230, %v196
    %v232 = vadd.f32 %v231, %v198
    %v233 = vrot.slane %v232, 4
    %v234 = vadd.f32 %v232, %v233
    %v235 = vrot.slane %v234, 2
    %v236 = vadd.f32 %v234, %v235
    %v237 = vrot.slane %v236, 1
    %v238 = vadd.f32 %v236, %v237
    %vm239 = vcmask 1040384
    %v240 = vsel %vm239, %v207, %v227
    %v241 = vsel %vm239, %v216, %v238
    %v242 = vrsqrt.pop %v240
    %v243 = vmul.f32 %v242, %v240
    %v244 = vmul.f32 %v243, %v242
    %v245 = vmul.f32 0.5, %v244
    %v246 = vsub.f32 1.5, %v245
    %v247 = vmul.f32 %v242, %v246
    %vm248 = vweird.f32 %v240
    %vm249 = vweird.f32 %v242
    %vm250 = vmor %vm248, %vm249
    %v251 = vsel %vm250, %v242, %v247
    %v252 = vrsqrt.pop %v241
    %v253 = vmul.f32 %v252, %v241
    %v254 = vmul.f32 %v253, %v252
    %v255 = vmul.f32 0.5, %v254
    %v256 = vsub.f32 1.5, %v255
    %v257 = vmul.f32 %v252, %v256
    %vm258 = vweird.f32 %v241
    %vm259 = vweird.f32 %v252
    %vm260 = vmor %vm258, %vm259
    %v261 = vsel %vm260, %v252, %v257
    %v262 = vmul.f32 %v107, %v251
    %v263 = vmul.f32 %v157, %v261
    %vm264 = vcmask 1041408
    %v265 = vsel %vm264, %v262, 0.0
    %v266 = vrot.slane %v265, 4
    %v267 = vadd.f32 %v265, %v266
    %v268 = vrot.slane %v267, 2
    %v269 = vadd.f32 %v267, %v268
    %v270 = vrot.slane %v269, 1
    %v271 = vadd.f32 %v269, %v270
    %v272 = vsel %vm264, %v263, 0.0
    %v273 = vrot.slane %v272, 4
    %v274 = vadd.f32 %v272, %v273
    %v275 = vrot.slane %v274, 2
    %v276 = vadd.f32 %v274, %v275
    %v277 = vrot.slane %v276, 1
    %v278 = vadd.f32 %v276, %v277
    %s279 = sld [smem:[#allocation2]]
    %v280 = vstv %s279
    %v281 = vadd.f32 %v271, %v280
    %v282 = vadd.f32 %v278, %v280
    %v285 = vrot.slane %v282, 7
    %v286 = vsel %vm239, %v281, %v285
    %v288 = vlaneseq
    %vm289 = vcmp.ge.s32.totalorder %v288, 0
    %vm290 = vcmp.lt.s32.totalorder %v288, 256
    %vm291 = vmand %vm289, %vm290
    %292 = vst.msk [vmem:[#allocation3] sm:$0x3] %vm291, %v286
    // Predicated region
    $region14: #{clip_regressor_forward.1} parent=1 // pred_check
      _
    $region15: #{clip_regressor_forward.1} parent=1 // pred_check_branch
      %294 = sbr.rel (0) target = $region17
    $region16: #{clip_regressor_forward.1} parent=1 // pred_region
      %296 = vsyncadd [#allocation4], 0
      %s298 = sshll.u32 [#allocation3], 4
      %s299 = int_to_ptr.vmem [resolvable:$true] %s298
      %s300 = sshll.u32 %s3, 4
      %s301 = int_to_ptr.hbm [resolvable:$true] %s300
      %303 = dma.vmem_to_hbm [thread:$0]  %s299, 32, %s301, [#allocation4]
    $region17: #{clip_regressor_forward.1} parent=1 // pred_fallthru
      _
    // Predicated region
    $region18: #{clip_regressor_forward.1} parent=1 // pred_check
      _
    $region19: #{clip_regressor_forward.1} parent=1 // pred_check_branch
      %305 = sbr.rel (0) target = $region21
    $region20: #{clip_regressor_forward.1} parent=1 // pred_region
      %307 = dma.done [#allocation4], 32
    $region21: #{clip_regressor_forward.1} parent=1 // pred_fallthru
      _
    %308 = vsyncpa [#allocation4], 1

</llo_original>
